<compile_context>
chip_gen: v5e
topology: v5e:2x2
jax: 0.10.0
libtpu: 0.0.40
codegen_flags: <defaults>
</compile_context>

<pallas_src>
import functools

import jax
import jax.numpy as jnp
from jax.experimental import pallas as pl
from jax.experimental.pallas import tpu as pltpu


def _round_up(x, m):
    return (x + m - 1) // m * m


# ----------------------------- Pallas kernel ------------------------------ #
def quadconv_kernel(pt_ref, wrg_ref, wb_ref, o_ref):
    # pt_ref  : [K_pad, TM]    transposed im2col patches of x (+ ones bias row)
    # wrg_ref : [2*Cp, K_pad]  rows 0:Cp = W_r (bias folded), Cp:2Cp = W_g
    # wb_ref  : [Cp, K_pad]    W_b (bias folded)
    # o_ref   : [Cp, TM]       out^T tile (lane dim = TM -> dense, unmasked vst)
    p = pt_ref[...]
    cp = wb_ref.shape[0]
    # x1 and x2 share the LHS patches -> one fused MXU matmul (incl. biases).
    xg = jnp.dot(wrg_ref[...], p, preferred_element_type=jnp.float32)
    # im2col(x*x) == elementwise square of im2col(x): compute on the VPU
    # instead of shipping a second patch matrix from HBM.
    x3 = jnp.dot(wb_ref[...], p * p, preferred_element_type=jnp.float32)
    o_ref[...] = xg[:cp, :] * xg[cp:, :] + x3


# ------------------------------- glue / host ------------------------------ #
def _im2col_t(x_nhwc, kh, kw):
    """[B,Hp,Wp,C] -> transposed patches [KH*KW*C, B*OH*OW] (stride 1, valid)."""
    B, Hp, Wp, C = x_nhwc.shape
    OH, OW = Hp - kh + 1, Wp - kw + 1
    cols = []
    for i in range(kh):
        for j in range(kw):
            cols.append(x_nhwc[:, i:i + OH, j:j + OW, :])       # [B,OH,OW,C]
    p = jnp.stack(cols, axis=0)                                 # [KH*KW,B,OH,OW,C]
    p = jnp.transpose(p, (0, 4, 1, 2, 3))                       # [KH*KW,C,B,OH,OW]
    return p.reshape(kh * kw * C, B * OH * OW), (B, OH, OW)


@functools.partial(jax.jit, static_argnames=("padding",))
def quadconv_forward(x_nchw, W_r, W_g, W_b, b_r, b_g, b_b, padding="valid"):
    """QuadConv forward. x_nchw: [B,Cin,H,W]; W_*: [Cout,Cin,KH,KW]; b_*: [Cout]."""
    assert padding in ("valid", "same")
    Cout, Cin, KH, KW = W_r.shape

    x = jnp.transpose(x_nchw, (0, 2, 3, 1)).astype(jnp.float32)     # NHWC
    if padding == "same":
        # stride-1 'same' (PyTorch: extra pad on the hi side for even kernels)
        x = jnp.pad(x, ((0, 0),
                        ((KH - 1) // 2, KH // 2),
                        ((KW - 1) // 2, KW // 2),
                        (0, 0)))

    # TODO(synk): replace host-side im2col (KH*KW x input-byte blowup in HBM)
    # with in-kernel accumulation over the taps (shifted [Cin x TM] matmuls).
    p_t, (B, OH, OW) = _im2col_t(x, KH, KW)          # [K, M]
    K, M = p_t.shape

    Cp = _round_up(Cout, 8)                          # sublane-aligned channels
    K_pad = _round_up(K + 1, 8)                      # +1 row for the folded bias
    TM = 1024 if M >= 1024 else _round_up(M, 128)    # lane-dense M tile
    M_pad = _round_up(M, TM)

    # patches^T: append ones row (bias) + zero rows; zero-pad the M axis.
    p_t = jnp.concatenate(
        [p_t,
         jnp.ones((1, M), jnp.float32),
         jnp.zeros((K_pad - K - 1, M), jnp.float32)], axis=0)
    p_t = jnp.pad(p_t, ((0, 0), (0, M_pad - M)))

    def to_mat_t(w, b):
        # [Cout,Cin,KH,KW] -> [Cp, K_pad]; column order (kh,kw,cin) matches the
        # patch row order; bias folded into column K.
        wt = jnp.transpose(w, (0, 2, 3, 1)).reshape(Cout, K).astype(jnp.float32)
        wt = jnp.concatenate(
            [wt,
             b.reshape(Cout, 1).astype(jnp.float32),
             jnp.zeros((Cout, K_pad - K - 1), jnp.float32)], axis=1)
        return jnp.pad(wt, ((0, Cp - Cout), (0, 0)))

    wrg_t = jnp.concatenate([to_mat_t(W_r, b_r), to_mat_t(W_g, b_g)], axis=0)
    wb_t = to_mat_t(W_b, b_b)

    # TODO(synk): optional bf16 cast of patches/weights (keep f32 accumulation +
    # f32 epilogue) for ~2x HBM bandwidth and the v5e bf16 MXU, if accuracy allows.

    grid = (M_pad // TM,)
    flops = 2 * M_pad * K_pad * 3 * Cp + 3 * Cp * M_pad + K_pad * M_pad
    bytes_accessed = 4 * (K_pad * M_pad + 3 * Cp * K_pad + Cp * M_pad)

    out_t = pl.pallas_call(
        quadconv_kernel,
        out_shape=jax.ShapeDtypeStruct((Cp, M_pad), jnp.float32),
        grid_spec=pltpu.PrefetchScalarGridSpec(
            num_scalar_prefetch=0,
            grid=grid,
            in_specs=[
                pl.BlockSpec((K_pad, TM), lambda i: (0, i)),      # patch^T tile
                pl.BlockSpec((2 * Cp, K_pad), lambda i: (0, 0)),  # resident W_r|W_g
                pl.BlockSpec((Cp, K_pad), lambda i: (0, 0)),      # resident W_b
            ],
            out_specs=pl.BlockSpec((Cp, TM), lambda i: (0, i)),
        ),
        compiler_params=pltpu.CompilerParams(
            dimension_semantics=("parallel",)),
        cost_estimate=pl.CostEstimate(
            flops=flops, transcendentals=0, bytes_accessed=bytes_accessed),
    )(p_t, wrg_t, wb_t)

    out = out_t[:Cout, :M].reshape(Cout, B, OH, OW)
    return jnp.transpose(out, (1, 0, 2, 3))                       # NCHW


# ------------------------------ reference --------------------------------- #
def quadconv_reference(x_nchw, W_r, W_g, W_b, b_r, b_g, b_b, padding="valid"):
    Cout, Cin, KH, KW = W_r.shape
    dn = ("NCHW", "OIHW", "NCHW")
    x = x_nchw
    if padding == "same":
        x = jnp.pad(x, ((0, 0), (0, 0),
                        ((KH - 1) // 2, KH // 2),
                        ((KW - 1) // 2, KW // 2)))

    def conv(inp, w, b):
        y = jax.lax.conv_general_dilated(inp, w, (1, 1), "VALID",
                                         dimension_numbers=dn)
        return y + b.reshape(1, -1, 1, 1)

    x1 = conv(x, W_r, b_r)
    x2 = conv(x, W_g, b_g)
    x3 = conv(x * x, W_b, b_b)
    return x1 * x2 + x3


# --------------------------------- main ------------------------------------ #
if __name__ == "__main__":
    key = jax.random.PRNGKey(0)
    kx, kr, kg, kb, kbr, kbg, kbb = jax.random.split(key, 7)

    B, Cin, H, W = 2, 4, 16, 16
    Cout, KH, KW = 8, 3, 3

    x = jax.random.normal(kx, (B, Cin, H, W), dtype=jnp.float32)

    # Non-trivial weights (module init has W_g = W_b = 0, which would hide bugs
    # in the x1*x2 + x3 fusion); scales mirror the truncnorm(scale=0.1) init.
    W_r = 0.1 * jax.random.truncated_normal(kr, -2.0, 2.0, (Cout, Cin, KH, KW), jnp.float32)
    W_g = 0.1 * jax.random.normal(kg, (Cout, Cin, KH, KW), jnp.float32)
    W_b = 0.1 * jax.random.normal(kb, (Cout, Cin, KH, KW), jnp.float32)
    b_r = 0.1 * jax.random.normal(kbr, (Cout,), jnp.float32)
    b_g = 1.0 + 0.1 * jax.random.normal(kbg, (Cout,), jnp.float32)
    b_b = 0.1 * jax.random.normal(kbb, (Cout,), jnp.float32)

    for padding in ("valid", "same"):
        out = quadconv_forward(x, W_r, W_g, W_b, b_r, b_g, b_b, padding=padding)
        out = jax.block_until_ready(out)
        ref = quadconv_reference(x, W_r, W_g, W_b, b_r, b_g, b_b, padding=padding)
        assert out.shape == ref.shape, (padding, out.shape, ref.shape)
        max_err = float(jnp.max(jnp.abs(out - ref)))
        assert jnp.allclose(out, ref, atol=1e-3, rtol=1e-3), (padding, max_err)

    print("KERNEL_OK")
</pallas_src>

<mosaic_0001>
module attributes {stable_mosaic.version = 11 : i64} {
  func.func @quadconv_kernel(%arg0: i32, %arg1: memref<40x512xf32, #tpu.memory_space<vmem>>, %arg2: memref<16x40xf32, #tpu.memory_space<vmem>>, %arg3: memref<8x40xf32, #tpu.memory_space<vmem>>, %arg4: memref<8x512xf32, #tpu.memory_space<vmem>>) attributes {dimension_semantics = [#tpu.dimension_semantics<parallel>], iteration_bounds = array<i64: 1>, scalar_prefetch = 0 : i64, scratch_operands = 0 : i64, tpu.core_type = #tpu.core_type<tc>, window_params = [{transform_indices = @transform_0, window_bounds = array<i64: 40, 512>}, {pipeline_mode = #tpu.pipeline_mode<synchronous>, transform_indices = @transform_1, window_bounds = array<i64: 16, 40>}, {pipeline_mode = #tpu.pipeline_mode<synchronous>, transform_indices = @transform_2, window_bounds = array<i64: 8, 40>}, {transform_indices = @transform_3, window_bounds = array<i64: 8, 512>}]} {
    %c0 = arith.constant 0 : index
    %c0_0 = arith.constant 0 : index
    %0 = vector.load %arg1[%c0, %c0_0] : memref<40x512xf32, #tpu.memory_space<vmem>>, vector<40x512xf32>
    %c0_1 = arith.constant 0 : index
    %c0_2 = arith.constant 0 : index
    %1 = vector.load %arg2[%c0_1, %c0_2] : memref<16x40xf32, #tpu.memory_space<vmem>>, vector<16x40xf32>
    %cst = arith.constant dense<0.000000e+00> : vector<16x512xf32>
    %2 = tpu.matmul %1, %0, %cst {dimension_numbers = #tpu.dot_dimension_numbers<[1], [0], [0], [1], [0, 0, 1, 1], [], []>} : vector<16x40xf32>, vector<40x512xf32>, vector<16x512xf32> -> vector<16x512xf32>
    %c0_3 = arith.constant 0 : index
    %c0_4 = arith.constant 0 : index
    %3 = vector.load %arg3[%c0_3, %c0_4] : memref<8x40xf32, #tpu.memory_space<vmem>>, vector<8x40xf32>
    %4 = arith.mulf %0, %0 : vector<40x512xf32>
    %cst_5 = arith.constant dense<0.000000e+00> : vector<8x512xf32>
    %5 = tpu.matmul %3, %4, %cst_5 {dimension_numbers = #tpu.dot_dimension_numbers<[1], [0], [0], [1], [0, 0, 1, 1], [], []>} : vector<8x40xf32>, vector<40x512xf32>, vector<8x512xf32> -> vector<8x512xf32>
    %6 = vector.extract_strided_slice %2 {offsets = [0, 0], sizes = [8, 512], strides = [1, 1]} : vector<16x512xf32> to vector<8x512xf32>
    %7 = vector.extract_strided_slice %2 {offsets = [8, 0], sizes = [8, 512], strides = [1, 1]} : vector<16x512xf32> to vector<8x512xf32>
    %8 = arith.mulf %6, %7 : vector<8x512xf32>
    %9 = arith.addf %8, %5 : vector<8x512xf32>
    %c0_6 = arith.constant 0 : index
    %c0_7 = arith.constant 0 : index
    %10 = vector.load %arg4[%c0_6, %c0_7] : memref<8x512xf32, #tpu.memory_space<vmem>>, vector<8x512xf32>
    tpu.vector_store %arg4[%c0_6, %c0_7], %9 {strides = array<i32>} : memref<8x512xf32, #tpu.memory_space<vmem>>, vector<8x512xf32>,
    return
  }
  func.func @transform_0(%arg0: i32) -> (i32, i32) {
    %c0_i32 = arith.constant 0 : i32
    %c0_i32_0 = arith.constant 0 : i32
    return %c0_i32, %arg0 : i32, i32
  }
  func.func @transform_1(%arg0: i32) -> (i32, i32) {
    %c0_i32 = arith.constant 0 : i32
    %c0_i32_0 = arith.constant 0 : i32
    %c0_i32_1 = arith.constant 0 : i32
    return %c0_i32, %c0_i32_0 : i32, i32
  }
  func.func @transform_2(%arg0: i32) -> (i32, i32) {
    %c0_i32 = arith.constant 0 : i32
    %c0_i32_0 = arith.constant 0 : i32
    %c0_i32_1 = arith.constant 0 : i32
    return %c0_i32, %c0_i32_0 : i32, i32
  }
  func.func @transform_3(%arg0: i32) -> (i32, i32) {
    %c0_i32 = arith.constant 0 : i32
    %c0_i32_0 = arith.constant 0 : i32
    return %c0_i32, %arg0 : i32, i32
  }
}

</mosaic_0001>

<llo_original>
// kernel: quadconv_forward.1
$region0: #{quadconv_forward.1}
  #allocation0 [shape = 'u32[]', space=smem, size = 0x4, offset = 0x4, fixed_abs, tag = 'smem constant byte address 0x4 - core index']
  #allocation1 [shape = 'u32[72,128]{1,0:T(1,128)}', space=vmem, size = 0x9000, scoped, tag = 'internal scratch']
  %s0 = inlined_call_operand.vmem [shape: f32[40,512], index: 0, kind: input, shape index: {}]
  %s1 = inlined_call_operand.vmem [shape: f32[16,40], index: 1, kind: input, shape index: {}]
  %s2 = inlined_call_operand.vmem [shape: f32[8,40], index: 2, kind: input, shape index: {}]
  %s3 = inlined_call_operand.vmem [shape: f32[8,512], index: 3, kind: output, shape index: {}]
  %s4 = sld [smem:[#allocation0]]
  $region22: #{quadconv_forward.1} parent=0
    _
  %s6 = ssub.s32 1, %s4
  %s7 = scalar_select 0, %s6, %s4
  // Predicated region
  $region2: #{quadconv_forward.1} parent=0 // pred_check
    _
  $region3: #{quadconv_forward.1} parent=0 // pred_check_branch
    %9 = sbr.rel (0) target = $region5
  $region4: #{quadconv_forward.1} parent=0 // pred_region
    _
  $region5: #{quadconv_forward.1} parent=0 // pred_fallthru
    _
  // Predicated region
  $region6: #{quadconv_forward.1} parent=0 // pred_check
    _
  $region7: #{quadconv_forward.1} parent=0 // pred_check_branch
    %11 = sbr.rel (0) target = $region9
  $region8: #{quadconv_forward.1} parent=0 // pred_region
    _
  $region9: #{quadconv_forward.1} parent=0 // pred_fallthru
    _
  // Predicated region
  $region10: #{quadconv_forward.1} parent=0 // pred_check
    _
  $region11: #{quadconv_forward.1} parent=0 // pred_check_branch
    %13 = sbr.rel (0) target = $region13
  $region12: #{quadconv_forward.1} parent=0 // pred_region
    _
  $region13: #{quadconv_forward.1} parent=0 // pred_fallthru
    _
  %v14 = vld [vmem:[%s0] sm:$0xff]
  %v15 = vld [vmem:[%s0 + $0x8] sm:$0xff]
  %v16 = vld [vmem:[%s0 + $0x10] sm:$0xff]
  %v17 = vld [vmem:[%s0 + $0x18] sm:$0xff]
  %v18 = vld [vmem:[%s0 + $0x20] sm:$0xff]
  %v19 = vld [vmem:[%s0 + $0x28] sm:$0xff]
  %v20 = vld [vmem:[%s0 + $0x30] sm:$0xff]
  %v21 = vld [vmem:[%s0 + $0x38] sm:$0xff]
  %v22 = vld [vmem:[%s0 + $0x40] sm:$0xff]
  %v23 = vld [vmem:[%s0 + $0x48] sm:$0xff]
  %v24 = vld [vmem:[%s0 + $0x50] sm:$0xff]
  %v25 = vld [vmem:[%s0 + $0x58] sm:$0xff]
  %v26 = vld [vmem:[%s0 + $0x60] sm:$0xff]
  %v27 = vld [vmem:[%s0 + $0x68] sm:$0xff]
  %v28 = vld [vmem:[%s0 + $0x70] sm:$0xff]
  %v29 = vld [vmem:[%s0 + $0x78] sm:$0xff]
  %v30 = vld [vmem:[%s0 + $0x80] sm:$0xff]
  %v31 = vld [vmem:[%s0 + $0x88] sm:$0xff]
  %v32 = vld [vmem:[%s0 + $0x90] sm:$0xff]
  %v33 = vld [vmem:[%s0 + $0x98] sm:$0xff]
  %v34 = vld [vmem:[%s1] sm:$0xff]
  %v35 = vld [vmem:[%s1 + $0x8] sm:$0xff]
  %vm36 = vcmask 326656
  %v38 = vsel %vm36, %v34, 0
  %v41 = vsel %vm36, %v35, 0
  %43 = vmatpush.msra.mxu0 0.0
  %44 = vmatpush.msra.mxu0 0.0
  %45 = vmatpush.msra.mxu0 0.0
  %46 = vmatpush.msra.mxu0 0.0
  %47 = vmatpush.msra.mxu0 0.0
  %48 = vmatpush.msra.mxu0 0.0
  %49 = vmatpush.msra.mxu0 0.0
  %50 = vmatpush.msra.mxu0 0.0
  %51 = vmatpush.msra.mxu0 0.0
  %52 = vmatpush.msra.mxu0 0.0
  %53 = vmatpush.msra.mxu0 0.0
  %54 = vmatpush.msra.mxu0 %v30
  %55 = vmatpush.msra.mxu0 %v26
  %56 = vmatpush.msra.mxu0 %v22
  %57 = vmatpush.msra.mxu0 %v18
  %58 = vmatpush.msra.mxu0 %v14
  %59 = vmatmul.f32.gmra.mxu0 %v38
  %v60 = vpop.f32.mrf.mxu0
  %v61 = vadd.f32 0.0, %v60
  %62 = vmatmul.f32.gmra.mxu0 %v41
  %v63 = vpop.f32.mrf.mxu0
  %v64 = vadd.f32 0.0, %v63
  %65 = vdwg.mxu0
  %66 = vmatpush.msra.mxu0 0.0
  %67 = vmatpush.msra.mxu0 0.0
  %68 = vmatpush.msra.mxu0 0.0
  %69 = vmatpush.msra.mxu0 0.0
  %70 = vmatpush.msra.mxu0 0.0
  %71 = vmatpush.msra.mxu0 0.0
  %72 = vmatpush.msra.mxu0 0.0
  %73 = vmatpush.msra.mxu0 0.0
  %74 = vmatpush.msra.mxu0 0.0
  %75 = vmatpush.msra.mxu0 0.0
  %76 = vmatpush.msra.mxu0 0.0
  %77 = vmatpush.msra.mxu0 %v31
  %78 = vmatpush.msra.mxu0 %v27
  %79 = vmatpush.msra.mxu0 %v23
  %80 = vmatpush.msra.mxu0 %v19
  %81 = vmatpush.msra.mxu0 %v15
  %82 = vmatmul.f32.gmra.mxu0 %v38
  %v83 = vpop.f32.mrf.mxu0
  %v84 = vadd.f32 0.0, %v83
  %85 = vmatmul.f32.gmra.mxu0 %v41
  %v86 = vpop.f32.mrf.mxu0
  %v87 = vadd.f32 0.0, %v86
  %88 = vdwg.mxu0
  %89 = vmatpush.msra.mxu0 0.0
  %90 = vmatpush.msra.mxu0 0.0
  %91 = vmatpush.msra.mxu0 0.0
  %92 = vmatpush.msra.mxu0 0.0
  %93 = vmatpush.msra.mxu0 0.0
  %94 = vmatpush.msra.mxu0 0.0
  %95 = vmatpush.msra.mxu0 0.0
  %96 = vmatpush.msra.mxu0 0.0
  %97 = vmatpush.msra.mxu0 0.0
  %98 = vmatpush.msra.mxu0 0.0
  %99 = vmatpush.msra.mxu0 0.0
  %100 = vmatpush.msra.mxu0 %v32
  %101 = vmatpush.msra.mxu0 %v28
  %102 = vmatpush.msra.mxu0 %v24
  %103 = vmatpush.msra.mxu0 %v20
  %104 = vmatpush.msra.mxu0 %v16
  %105 = vmatmul.f32.gmra.mxu0 %v38
  %v106 = vpop.f32.mrf.mxu0
  %v107 = vadd.f32 0.0, %v106
  %108 = vmatmul.f32.gmra.mxu0 %v41
  %v109 = vpop.f32.mrf.mxu0
  %v110 = vadd.f32 0.0, %v109
  %111 = vdwg.mxu0
  %112 = vmatpush.msra.mxu0 0.0
  %113 = vmatpush.msra.mxu0 0.0
  %114 = vmatpush.msra.mxu0 0.0
  %115 = vmatpush.msra.mxu0 0.0
  %116 = vmatpush.msra.mxu0 0.0
  %117 = vmatpush.msra.mxu0 0.0
  %118 = vmatpush.msra.mxu0 0.0
  %119 = vmatpush.msra.mxu0 0.0
  %120 = vmatpush.msra.mxu0 0.0
  %121 = vmatpush.msra.mxu0 0.0
  %122 = vmatpush.msra.mxu0 0.0
  %123 = vmatpush.msra.mxu0 %v33
  %124 = vmatpush.msra.mxu0 %v29
  %125 = vmatpush.msra.mxu0 %v25
  %126 = vmatpush.msra.mxu0 %v21
  %127 = vmatpush.msra.mxu0 %v17
  %128 = vmatmul.f32.gmra.mxu0 %v38
  %v129 = vpop.f32.mrf.mxu0
  %v130 = vadd.f32 0.0, %v129
  %131 = vmatmul.f32.gmra.mxu0 %v41
  %v132 = vpop.f32.mrf.mxu0
  %v133 = vadd.f32 0.0, %v132
  %134 = vdwg.mxu0
  %v135 = vld [vmem:[%s2] sm:$0xff]
  %v136 = vmul.f32 %v14, %v14
  %v137 = vmul.f32 %v15, %v15
  %v138 = vmul.f32 %v16, %v16
  %v139 = vmul.f32 %v17, %v17
  %v140 = vmul.f32 %v18, %v18
  %v141 = vmul.f32 %v19, %v19
  %v142 = vmul.f32 %v20, %v20
  %v143 = vmul.f32 %v21, %v21
  %v144 = vmul.f32 %v22, %v22
  %v145 = vmul.f32 %v23, %v23
  %v146 = vmul.f32 %v24, %v24
  %v147 = vmul.f32 %v25, %v25
  %v148 = vmul.f32 %v26, %v26
  %v149 = vmul.f32 %v27, %v27
  %v150 = vmul.f32 %v28, %v28
  %v151 = vmul.f32 %v29, %v29
  %v152 = vmul.f32 %v30, %v30
  %v153 = vmul.f32 %v31, %v31
  %v154 = vmul.f32 %v32, %v32
  %v155 = vmul.f32 %v33, %v33
  %v157 = vsel %vm36, %v135, 0
  %159 = vmatpush.msra.mxu0 0.0
  %160 = vmatpush.msra.mxu0 0.0
  %161 = vmatpush.msra.mxu0 0.0
  %162 = vmatpush.msra.mxu0 0.0
  %163 = vmatpush.msra.mxu0 0.0
  %164 = vmatpush.msra.mxu0 0.0
  %165 = vmatpush.msra.mxu0 0.0
  %166 = vmatpush.msra.mxu0 0.0
  %167 = vmatpush.msra.mxu0 0.0
  %168 = vmatpush.msra.mxu0 0.0
  %169 = vmatpush.msra.mxu0 0.0
  %170 = vmatpush.msra.mxu0 %v152
  %171 = vmatpush.msra.mxu0 %v148
  %172 = vmatpush.msra.mxu0 %v144
  %173 = vmatpush.msra.mxu0 %v140
  %174 = vmatpush.msra.mxu0 %v136
  %175 = vmatmul.f32.gmra.mxu0 %v157
  %v176 = vpop.f32.mrf.mxu0
  %v177 = vadd.f32 0.0, %v176
  %178 = vdwg.mxu0
  %179 = vmatpush.msra.mxu0 0.0
  %180 = vmatpush.msra.mxu0 0.0
  %181 = vmatpush.msra.mxu0 0.0
  %182 = vmatpush.msra.mxu0 0.0
  %183 = vmatpush.msra.mxu0 0.0
  %184 = vmatpush.msra.mxu0 0.0
  %185 = vmatpush.msra.mxu0 0.0
  %186 = vmatpush.msra.mxu0 0.0
  %187 = vmatpush.msra.mxu0 0.0
  %188 = vmatpush.msra.mxu0 0.0
  %189 = vmatpush.msra.mxu0 0.0
  %190 = vmatpush.msra.mxu0 %v153
  %191 = vmatpush.msra.mxu0 %v149
  %192 = vmatpush.msra.mxu0 %v145
  %193 = vmatpush.msra.mxu0 %v141
  %194 = vmatpush.msra.mxu0 %v137
  %195 = vmatmul.f32.gmra.mxu0 %v157
  %v196 = vpop.f32.mrf.mxu0
  %v197 = vadd.f32 0.0, %v196
  %198 = vdwg.mxu0
  %199 = vmatpush.msra.mxu0 0.0
  %200 = vmatpush.msra.mxu0 0.0
  %201 = vmatpush.msra.mxu0 0.0
  %202 = vmatpush.msra.mxu0 0.0
  %203 = vmatpush.msra.mxu0 0.0
  %204 = vmatpush.msra.mxu0 0.0
  %205 = vmatpush.msra.mxu0 0.0
  %206 = vmatpush.msra.mxu0 0.0
  %207 = vmatpush.msra.mxu0 0.0
  %208 = vmatpush.msra.mxu0 0.0
  %209 = vmatpush.msra.mxu0 0.0
  %210 = vmatpush.msra.mxu0 %v154
  %211 = vmatpush.msra.mxu0 %v150
  %212 = vmatpush.msra.mxu0 %v146
  %213 = vmatpush.msra.mxu0 %v142
  %214 = vmatpush.msra.mxu0 %v138
  %215 = vmatmul.f32.gmra.mxu0 %v157
  %v216 = vpop.f32.mrf.mxu0
  %v217 = vadd.f32 0.0, %v216
  %218 = vdwg.mxu0
  %219 = vmatpush.msra.mxu0 0.0
  %220 = vmatpush.msra.mxu0 0.0
  %221 = vmatpush.msra.mxu0 0.0
  %222 = vmatpush.msra.mxu0 0.0
  %223 = vmatpush.msra.mxu0 0.0
  %224 = vmatpush.msra.mxu0 0.0
  %225 = vmatpush.msra.mxu0 0.0
  %226 = vmatpush.msra.mxu0 0.0
  %227 = vmatpush.msra.mxu0 0.0
  %228 = vmatpush.msra.mxu0 0.0
  %229 = vmatpush.msra.mxu0 0.0
  %230 = vmatpush.msra.mxu0 %v155
  %231 = vmatpush.msra.mxu0 %v151
  %232 = vmatpush.msra.mxu0 %v147
  %233 = vmatpush.msra.mxu0 %v143
  %234 = vmatpush.msra.mxu0 %v139
  %235 = vmatmul.f32.gmra.mxu0 %v157
  %v236 = vpop.f32.mrf.mxu0
  %v237 = vadd.f32 0.0, %v236
  %238 = vdwg.mxu0
  %v239 = vmul.f32 %v61, %v64
  %v240 = vmul.f32 %v84, %v87
  %v241 = vmul.f32 %v107, %v110
  %v242 = vmul.f32 %v130, %v133
  %v243 = vadd.f32 %v239, %v177
  %v244 = vadd.f32 %v240, %v197
  %v245 = vadd.f32 %v241, %v217
  %v246 = vadd.f32 %v242, %v237
  %247 = vst [vmem:[%s3] sm:$0xff] %v243
  %248 = vst [vmem:[%s3 + $0x8] sm:$0xff] %v244
  %249 = vst [vmem:[%s3 + $0x10] sm:$0xff] %v245
  %250 = vst [vmem:[%s3 + $0x18] sm:$0xff] %v246
  // Predicated region
  $region14: #{quadconv_forward.1} parent=0 // pred_check
    _
  $region15: #{quadconv_forward.1} parent=0 // pred_check_branch
    %252 = sbr.rel (0) target = $region17
  $region16: #{quadconv_forward.1} parent=0 // pred_region
    _
  $region17: #{quadconv_forward.1} parent=0 // pred_fallthru
    _
  // Predicated region
  $region18: #{quadconv_forward.1} parent=0 // pred_check
    _
  $region19: #{quadconv_forward.1} parent=0 // pred_check_branch
    %254 = sbr.rel (0) target = $region21
  $region20: #{quadconv_forward.1} parent=0 // pred_region
    _
  $region21: #{quadconv_forward.1} parent=0 // pred_fallthru
    _

</llo_original>
